<compile_context>
chip_gen: v5e
topology: v5e:2x2
jax: 0.10.0
libtpu: 0.0.40
codegen_flags: <defaults>
</compile_context>

<pallas_src>
import jax
import jax.numpy as jnp
import numpy as np
from jax.experimental import pallas as pl
from jax.experimental.pallas import tpu as pltpu


# ----------------------------- fused Pallas kernel -----------------------------

def _make_fused_loss_kernel(B, C):
    """One fused kernel: streams x/d over T, computes every reduction of Loss."""
    inv_b = 1.0 / float(B)
    scale2 = 10.0 * float(B) / 256.0

    def kernel(x_ref, d_ref, x1_ref, d1_ref, m1_ref, x2_ref, d2_ref,
               ow_ref, wave_ref, mu_ref, lv_ref, out_ref, acc_ref, side_ref):
        t = pl.program_id(0)
        nt = pl.num_programs(0)

        # ---- step 0: zero the accumulator, compute all small side losses ----
        @pl.when(t == 0)
        def _init():
            acc_ref[...] = jnp.zeros_like(acc_ref)

            def ce_sum(logits, tgt, weight=None):
                logits = logits.astype(jnp.float32)
                tgt = tgt.astype(jnp.int32)                       # (N, 1)
                mx = jnp.max(logits, axis=-1, keepdims=True)
                lse = mx + jnp.log(jnp.sum(jnp.exp(logits - mx),
                                           axis=-1, keepdims=True))
                ids = jax.lax.broadcasted_iota(jnp.int32, logits.shape, 1)
                picked = jnp.sum(jnp.where(ids == tgt, logits, 0.0),
                                 axis=-1, keepdims=True)
                ce = lse - picked                                  # (N, 1)
                if weight is not None:
                    ce = ce * weight
                return jnp.sum(ce)

            loss1 = ce_sum(x1_ref[...], d1_ref[...],
                           m1_ref[...].astype(jnp.float32))
            loss2 = ce_sum(x2_ref[...], d2_ref[...]) * scale2     # scale folded in

            diff = (ow_ref[...].astype(jnp.float32)
                    - wave_ref[...].astype(jnp.float32))
            loss31 = jnp.sum(diff * diff) * (inv_b * 0.01)
            mu = mu_ref[...].astype(jnp.float32)
            lv = lv_ref[...].astype(jnp.float32)
            loss32 = jnp.sum(-1.0 - lv + mu * mu + jnp.exp(lv)) * (inv_b * 0.01)
            loss3 = loss31 + loss32 * 0.01

            side_ref[0] = loss1
            side_ref[1] = loss2
            side_ref[2] = loss3

        # ---- every step: streamed loss0 partial over one (B, C, tileT) tile --
        x = x_ref[...].astype(jnp.float32)
        d = d_ref[...].astype(jnp.float32)
        # channel weights (0,1,1,2,4,1,...) from iota + scalar selects
        # (no captured array constants).
        ch = jax.lax.broadcasted_iota(jnp.int32, (1, C, 1), 1)
        w = jnp.where(ch == 0, 0.0,
                      jnp.where(ch == 3, 2.0,
                                jnp.where(ch == 4, 4.0, 1.0)))
        s = jnp.sum(d * jnp.log(x + 1e-9), axis=1)     # (B, tileT)
        m = jnp.sum(d * w, axis=1)                     # (B, tileT)
        acc_ref[...] += s * (m + 1.0)                  # elementwise f32 accumulate

        # ---- last step: one final reduce + scalar writes ---------------------
        @pl.when(t == nt - 1)
        def _finalize():
            loss0 = -jnp.sum(acc_ref[...]) * inv_b
            loss1 = side_ref[0]
            loss2 = side_ref[1]
            loss3 = side_ref[2]
            out_ref[0] = loss0 + loss1 + loss2 + loss3
            out_ref[1] = loss0
            out_ref[2] = loss1
            out_ref[3] = loss3

    return kernel


# ------------------------------- wrapper -----------------------------------

def _choose_tile_t(T, max_tile_t):
    """Largest multiple of 128 <= max_tile_t that divides T; else the full T."""
    if T <= max_tile_t or T % 128 != 0:
        return T
    t = (max_tile_t // 128) * 128
    while t >= 128:
        if T % t == 0:
            return t
        t -= 128
    return T


def loss_forward(x, d, x1, d1, m1, x2, d2, ow, wave, mu, logvar,
                 *, max_tile_t=2048):
    B, C, T = x.shape
    tile_t = _choose_tile_t(T, max_tile_t)
    n_steps = T // tile_t
    kernel = _make_fused_loss_kernel(B, C)

    # Targets / weights: free metadata reshapes to 2-D; dtype casts happen
    # inside the kernel (so bf16/f32 producers both work, no wrapper copies).
    d1_2d = d1.reshape(-1, 1)
    m1_2d = m1.reshape(-1, 1)
    d2_2d = d2.reshape(-1, 1)

    def const_spec(a):
        # Full-array block, constant index map -> fetched once, stays resident.
        return pl.BlockSpec(a.shape, lambda t, _nd=a.ndim: (0,) * _nd)

    in_specs = [
        pl.BlockSpec((B, C, tile_t), lambda t: (0, 0, t)),   # x  (streamed over T)
        pl.BlockSpec((B, C, tile_t), lambda t: (0, 0, t)),   # d  (streamed over T)
        const_spec(x1), const_spec(d1_2d), const_spec(m1_2d),
        const_spec(x2), const_spec(d2_2d),
        const_spec(ow), const_spec(wave), const_spec(mu), const_spec(logvar),
    ]

    side_inputs = (x1, d1_2d, m1_2d, x2, d2_2d, ow, wave, mu, logvar)
    bytes_accessed = int(sum(int(a.size) * a.dtype.itemsize
                             for a in (x, d) + side_inputs) + 4 * 4)
    transcendentals = int(B * C * T + x1.size + x2.size + mu.size)
    flops = int(6 * B * C * T + 6 * (x1.size + x2.size) + 4 * ow.size + 6 * mu.size)

    out = pl.pallas_call(
        kernel,
        out_shape=jax.ShapeDtypeStruct((4,), jnp.float32),
        grid_spec=pltpu.PrefetchScalarGridSpec(
            num_scalar_prefetch=0,
            grid=(n_steps,),
            in_specs=in_specs,
            out_specs=pl.BlockSpec((4,), lambda t: (0,),
                                   memory_space=pltpu.MemorySpace.SMEM),
            scratch_shapes=[
                pltpu.VMEM((B, tile_t), jnp.float32),   # loss0 partial accumulator
                pltpu.SMEM((4,), jnp.float32),          # loss1/loss2/loss3 carry
            ]),
        compiler_params=pltpu.CompilerParams(
            dimension_semantics=("arbitrary",),          # T axis accumulates
            vmem_limit_bytes=48 << 20),                  # > v6e default, < v7x phys
        cost_estimate=pl.CostEstimate(flops=flops,
                                      transcendentals=transcendentals,
                                      bytes_accessed=bytes_accessed),
    )(x, d, x1, d1_2d, m1_2d, x2, d2_2d, ow, wave, mu, logvar)

    return out[0], out[1], out[2], out[3]


# ----------------------------- pure-JAX reference ---------------------------

def _reference(x, d, x1, d1, m1, x2, d2, ow, wave, mu, logvar):
    B, C, T = x.shape
    wts = np.ones((C - 1,), np.float32)
    if C - 1 > 2:
        wts[2] = 2.0
    if C - 1 > 3:
        wts[3] = 4.0
    m = jnp.sum(d[:, 1:, :] * jnp.asarray(wts).reshape(1, -1, 1), axis=1)
    loss = jnp.sum(d * jnp.log(x + 1e-9), axis=1) * (m + 1.0)
    loss0 = -jnp.sum(loss) / B

    def ce(logits, t):
        lse = jax.scipy.special.logsumexp(logits, axis=-1)
        picked = jnp.take_along_axis(logits, t[:, None], axis=-1)[:, 0]
        return lse - picked

    loss1 = jnp.sum(ce(x1, d1) * m1)
    loss2 = jnp.sum(ce(x2, d2)) * 10.0 * B / 256.0
    loss31 = jnp.sum(jnp.square(ow - wave)) / B / 100.0
    loss32 = jnp.sum(-1.0 - logvar + mu ** 2 + jnp.exp(logvar)) / B / 100.0
    loss3 = loss31 + loss32 * 0.01
    return loss0 + loss1 + loss2 + loss3, loss0, loss1, loss3


# --------------------------------- main -------------------------------------

if __name__ == "__main__":
    key = jax.random.PRNGKey(0)
    ks = jax.random.split(key, 12)

    B, C, T = 2, 5, 512        # x/d (C >= 5 required by the channel weighting)
    N1, NC1 = 8, 16            # x1 logits
    N2, NC2 = 8, 16            # x2 logits
    L = 128                    # waveform length
    Z = 32                     # latent dim

    x = jax.nn.softmax(jax.random.normal(ks[0], (B, C, T)), axis=1)
    d = jax.nn.softmax(jax.random.normal(ks[1], (B, C, T)), axis=1)
    x1 = jax.random.normal(ks[2], (N1, NC1))
    d1 = jax.random.randint(ks[3], (N1,), 0, NC1)
    m1 = jax.random.uniform(ks[4], (N1,))
    x2 = jax.random.normal(ks[5], (N2, NC2))
    d2 = jax.random.randint(ks[6], (N2,), 0, NC2)
    ow = jax.random.normal(ks[7], (B, L))
    wave = jax.random.normal(ks[8], (B, L))
    mu = jax.random.normal(ks[9], (B, Z))
    logvar = 0.1 * jax.random.normal(ks[10], (B, Z))

    # max_tile_t=128 -> 4-step streamed grid even at these small test shapes,
    # exercising the double-buffered pipeline + accumulator path.
    out = loss_forward(x, d, x1, d1, m1, x2, d2, ow, wave, mu, logvar,
                       max_tile_t=128)
    out = jax.block_until_ready(out)

    ref = _reference(x, d, x1, d1, m1, x2, d2, ow, wave, mu, logvar)
    for got, want in zip(out, ref):
        np.testing.assert_allclose(np.asarray(got), np.asarray(want),
                                   rtol=1e-4, atol=1e-4)

    print("KERNEL_OK")
</pallas_src>

<mosaic_0001>
module attributes {stable_mosaic.version = 11 : i64} {
  func.func @kernel(%arg0: i32, %arg1: memref<2x5x128xf32, #tpu.memory_space<vmem>>, %arg2: memref<2x5x128xf32, #tpu.memory_space<vmem>>, %arg3: memref<8x16xf32, #tpu.memory_space<vmem>>, %arg4: memref<8x1xi32, #tpu.memory_space<vmem>>, %arg5: memref<8x1xf32, #tpu.memory_space<vmem>>, %arg6: memref<8x16xf32, #tpu.memory_space<vmem>>, %arg7: memref<8x1xi32, #tpu.memory_space<vmem>>, %arg8: memref<2x128xf32, #tpu.memory_space<vmem>>, %arg9: memref<2x128xf32, #tpu.memory_space<vmem>>, %arg10: memref<2x32xf32, #tpu.memory_space<vmem>>, %arg11: memref<2x32xf32, #tpu.memory_space<vmem>>, %arg12: memref<4xf32, #tpu.memory_space<smem>>, %arg13: memref<2x128xf32, #tpu.memory_space<vmem>>, %arg14: memref<4xf32, #tpu.memory_space<smem>>) attributes {dimension_semantics = [#tpu.dimension_semantics<arbitrary>], iteration_bounds = array<i64: 4>, scalar_prefetch = 0 : i64, scratch_operands = 2 : i64, tpu.core_type = #tpu.core_type<tc>, window_params = [{transform_indices = @transform_0, window_bounds = array<i64: 2, 5, 128>}, {transform_indices = @transform_1, window_bounds = array<i64: 2, 5, 128>}, {pipeline_mode = #tpu.pipeline_mode<synchronous>, transform_indices = @transform_2, window_bounds = array<i64: 8, 16>}, {pipeline_mode = #tpu.pipeline_mode<synchronous>, transform_indices = @transform_3, window_bounds = array<i64: 8, 1>}, {pipeline_mode = #tpu.pipeline_mode<synchronous>, transform_indices = @transform_4, window_bounds = array<i64: 8, 1>}, {pipeline_mode = #tpu.pipeline_mode<synchronous>, transform_indices = @transform_5, window_bounds = array<i64: 8, 16>}, {pipeline_mode = #tpu.pipeline_mode<synchronous>, transform_indices = @transform_6, window_bounds = array<i64: 8, 1>}, {pipeline_mode = #tpu.pipeline_mode<synchronous>, transform_indices = @transform_7, window_bounds = array<i64: 2, 128>}, {pipeline_mode = #tpu.pipeline_mode<synchronous>, transform_indices = @transform_8, window_bounds = array<i64: 2, 128>}, {pipeline_mode = #tpu.pipeline_mode<synchronous>, transform_indices = @transform_9, window_bounds = array<i64: 2, 32>}, {pipeline_mode = #tpu.pipeline_mode<synchronous>, transform_indices = @transform_10, window_bounds = array<i64: 2, 32>}, {transform_indices = @transform_11, window_bounds = array<i64: 4>}]} {
    %c0_i32 = arith.constant 0 : i32
    %0 = arith.cmpi eq, %arg0, %c0_i32 : i32
    %1 = arith.extui %0 : i1 to i32
    %c0_i32_0 = arith.constant 0 : i32
    %2 = arith.cmpi ne, %1, %c0_i32_0 : i32
    scf.if %2 {
      %cst_20 = arith.constant 0.000000e+00 : f32
      %36 = vector.broadcast %cst_20 : f32 to vector<2x128xf32>
      %c0_21 = arith.constant 0 : index
      %c0_22 = arith.constant 0 : index
      %37 = vector.load %arg13[%c0_21, %c0_22] : memref<2x128xf32, #tpu.memory_space<vmem>>, vector<2x128xf32>
      tpu.vector_store %arg13[%c0_21, %c0_22], %36 {strides = array<i32>} : memref<2x128xf32, #tpu.memory_space<vmem>>, vector<2x128xf32>,
      %c0_23 = arith.constant 0 : index
      %c0_24 = arith.constant 0 : index
      %38 = vector.load %arg3[%c0_23, %c0_24] : memref<8x16xf32, #tpu.memory_space<vmem>>, vector<8x16xf32>
      %c0_25 = arith.constant 0 : index
      %c0_26 = arith.constant 0 : index
      %39 = vector.load %arg4[%c0_25, %c0_26] : memref<8x1xi32, #tpu.memory_space<vmem>>, vector<8x1xi32>
      %c0_27 = arith.constant 0 : index
      %c0_28 = arith.constant 0 : index
      %40 = vector.load %arg5[%c0_27, %c0_28] : memref<8x1xf32, #tpu.memory_space<vmem>>, vector<8x1xf32>
      %cst_29 = arith.constant dense<0xFF800000> : vector<8xf32>
      %41 = vector.multi_reduction <maximumf>, %38, %cst_29 [1] : vector<8x16xf32> to vector<8xf32>
      %42 = vector.shape_cast %41 : vector<8xf32> to vector<8x1xf32>
      %43 = vector.broadcast %42 : vector<8x1xf32> to vector<8x16xf32>
      %44 = arith.subf %38, %43 : vector<8x16xf32>
      %45 = math.exp %44 : vector<8x16xf32>
      %cst_30 = arith.constant dense<0.000000e+00> : vector<8xf32>
      %46 = vector.multi_reduction <add>, %45, %cst_30 [1] : vector<8x16xf32> to vector<8xf32>
      %47 = vector.shape_cast %46 : vector<8xf32> to vector<8x1xf32>
      %48 = math.log %47 : vector<8x1xf32>
      %49 = arith.addf %42, %48 : vector<8x1xf32>
      %50 = tpu.iota {dimensions = array<i32: 1>} : vector<8x16xi32>
      %51 = vector.broadcast %39 : vector<8x1xi32> to vector<8x16xi32>
      %52 = arith.cmpi eq, %50, %51 : vector<8x16xi32>
      %cst_31 = arith.constant 0.000000e+00 : f32
      %53 = vector.broadcast %cst_31 : f32 to vector<8x16xf32>
      %54 = arith.select %52, %38, %53 : vector<8x16xi1>, vector<8x16xf32>
      %cst_32 = arith.constant dense<0.000000e+00> : vector<8xf32>
      %55 = vector.multi_reduction <add>, %54, %cst_32 [1] : vector<8x16xf32> to vector<8xf32>
      %56 = vector.shape_cast %55 : vector<8xf32> to vector<8x1xf32>
      %57 = arith.subf %49, %56 : vector<8x1xf32>
      %58 = arith.mulf %57, %40 : vector<8x1xf32>
      %59 = vector.shape_cast %58 : vector<8x1xf32> to vector<1x8x1xf32>
      %cst_33 = arith.constant dense<0.000000e+00> : vector<1xf32>
      %60 = vector.multi_reduction <add>, %59, %cst_33 [1, 2] : vector<1x8x1xf32> to vector<1xf32>
      %61 = vector.shape_cast %60 : vector<1xf32> to vector<1x1x1xf32>
      %62 = vector.extract %61[0, 0, 0] : f32 from vector<1x1x1xf32>
      %c0_34 = arith.constant 0 : index
      %c0_35 = arith.constant 0 : index
      %63 = vector.load %arg6[%c0_34, %c0_35] : memref<8x16xf32, #tpu.memory_space<vmem>>, vector<8x16xf32>
      %c0_36 = arith.constant 0 : index
      %c0_37 = arith.constant 0 : index
      %64 = vector.load %arg7[%c0_36, %c0_37] : memref<8x1xi32, #tpu.memory_space<vmem>>, vector<8x1xi32>
      %cst_38 = arith.constant dense<0xFF800000> : vector<8xf32>
      %65 = vector.multi_reduction <maximumf>, %63, %cst_38 [1] : vector<8x16xf32> to vector<8xf32>
      %66 = vector.shape_cast %65 : vector<8xf32> to vector<8x1xf32>
      %67 = vector.broadcast %66 : vector<8x1xf32> to vector<8x16xf32>
      %68 = arith.subf %63, %67 : vector<8x16xf32>
      %69 = math.exp %68 : vector<8x16xf32>
      %cst_39 = arith.constant dense<0.000000e+00> : vector<8xf32>
      %70 = vector.multi_reduction <add>, %69, %cst_39 [1] : vector<8x16xf32> to vector<8xf32>
      %71 = vector.shape_cast %70 : vector<8xf32> to vector<8x1xf32>
      %72 = math.log %71 : vector<8x1xf32>
      %73 = arith.addf %66, %72 : vector<8x1xf32>
      %74 = tpu.iota {dimensions = array<i32: 1>} : vector<8x16xi32>
      %75 = vector.broadcast %64 : vector<8x1xi32> to vector<8x16xi32>
      %76 = arith.cmpi eq, %74, %75 : vector<8x16xi32>
      %cst_40 = arith.constant 0.000000e+00 : f32
      %77 = vector.broadcast %cst_40 : f32 to vector<8x16xf32>
      %78 = arith.select %76, %63, %77 : vector<8x16xi1>, vector<8x16xf32>
      %cst_41 = arith.constant dense<0.000000e+00> : vector<8xf32>
      %79 = vector.multi_reduction <add>, %78, %cst_41 [1] : vector<8x16xf32> to vector<8xf32>
      %80 = vector.shape_cast %79 : vector<8xf32> to vector<8x1xf32>
      %81 = arith.subf %73, %80 : vector<8x1xf32>
      %82 = vector.shape_cast %81 : vector<8x1xf32> to vector<1x8x1xf32>
      %cst_42 = arith.constant dense<0.000000e+00> : vector<1xf32>
      %83 = vector.multi_reduction <add>, %82, %cst_42 [1, 2] : vector<1x8x1xf32> to vector<1xf32>
      %84 = vector.shape_cast %83 : vector<1xf32> to vector<1x1x1xf32>
      %85 = vector.extract %84[0, 0, 0] : f32 from vector<1x1x1xf32>
      %cst_43 = arith.constant 7.812500e-02 : f32
      %86 = arith.mulf %85, %cst_43 : f32
      %c0_44 = arith.constant 0 : index
      %c0_45 = arith.constant 0 : index
      %87 = vector.load %arg8[%c0_44, %c0_45] : memref<2x128xf32, #tpu.memory_space<vmem>>, vector<2x128xf32>
      %c0_46 = arith.constant 0 : index
      %c0_47 = arith.constant 0 : index
      %88 = vector.load %arg9[%c0_46, %c0_47] : memref<2x128xf32, #tpu.memory_space<vmem>>, vector<2x128xf32>
      %89 = arith.subf %87, %88 : vector<2x128xf32>
      %90 = arith.mulf %89, %89 : vector<2x128xf32>
      %91 = vector.shape_cast %90 : vector<2x128xf32> to vector<1x2x128xf32>
      %cst_48 = arith.constant dense<0.000000e+00> : vector<1xf32>
      %92 = vector.multi_reduction <add>, %91, %cst_48 [1, 2] : vector<1x2x128xf32> to vector<1xf32>
      %93 = vector.shape_cast %92 : vector<1xf32> to vector<1x1x1xf32>
      %94 = vector.extract %93[0, 0, 0] : f32 from vector<1x1x1xf32>
      %cst_49 = arith.constant 5.000000e-03 : f32
      %95 = arith.mulf %94, %cst_49 : f32
      %c0_50 = arith.constant 0 : index
      %c0_51 = arith.constant 0 : index
      %96 = vector.load %arg10[%c0_50, %c0_51] : memref<2x32xf32, #tpu.memory_space<vmem>>, vector<2x32xf32>
      %c0_52 = arith.constant 0 : index
      %c0_53 = arith.constant 0 : index
      %97 = vector.load %arg11[%c0_52, %c0_53] : memref<2x32xf32, #tpu.memory_space<vmem>>, vector<2x32xf32>
      %cst_54 = arith.constant -1.000000e+00 : f32
      %98 = vector.broadcast %cst_54 : f32 to vector<2x32xf32>
      %99 = arith.subf %98, %97 : vector<2x32xf32>
      %100 = arith.mulf %96, %96 : vector<2x32xf32>
      %101 = arith.addf %99, %100 : vector<2x32xf32>
      %102 = math.exp %97 : vector<2x32xf32>
      %103 = arith.addf %101, %102 : vector<2x32xf32>
      %104 = vector.shape_cast %103 : vector<2x32xf32> to vector<1x2x32xf32>
      %cst_55 = arith.constant dense<0.000000e+00> : vector<1xf32>
      %105 = vector.multi_reduction <add>, %104, %cst_55 [1, 2] : vector<1x2x32xf32> to vector<1xf32>
      %106 = vector.shape_cast %105 : vector<1xf32> to vector<1x1x1xf32>
      %107 = vector.extract %106[0, 0, 0] : f32 from vector<1x1x1xf32>
      %cst_56 = arith.constant 5.000000e-03 : f32
      %108 = arith.mulf %107, %cst_56 : f32
      %cst_57 = arith.constant 0.00999999977 : f32
      %109 = arith.mulf %108, %cst_57 : f32
      %110 = arith.addf %95, %109 : f32
      %c0_58 = arith.constant 0 : index
      %111 = memref.load %arg14[%c0_58] : memref<4xf32, #tpu.memory_space<smem>>
      memref.store %62, %arg14[%c0_58] : memref<4xf32, #tpu.memory_space<smem>>
      %c1 = arith.constant 1 : index
      %112 = memref.load %arg14[%c1] : memref<4xf32, #tpu.memory_space<smem>>
      memref.store %86, %arg14[%c1] : memref<4xf32, #tpu.memory_space<smem>>
      %c2 = arith.constant 2 : index
      %113 = memref.load %arg14[%c2] : memref<4xf32, #tpu.memory_space<smem>>
      memref.store %110, %arg14[%c2] : memref<4xf32, #tpu.memory_space<smem>>
    } else {
    }
    %c0 = arith.constant 0 : index
    %c0_1 = arith.constant 0 : index
    %c0_2 = arith.constant 0 : index
    %3 = vector.load %arg1[%c0, %c0_1, %c0_2] : memref<2x5x128xf32, #tpu.memory_space<vmem>>, vector<2x5x128xf32>
    %c0_3 = arith.constant 0 : index
    %c0_4 = arith.constant 0 : index
    %c0_5 = arith.constant 0 : index
    %4 = vector.load %arg2[%c0_3, %c0_4, %c0_5] : memref<2x5x128xf32, #tpu.memory_space<vmem>>, vector<2x5x128xf32>
    %5 = tpu.iota {dimensions = array<i32: 1>} : vector<1x5x1xi32>
    %c0_i32_6 = arith.constant 0 : i32
    %6 = vector.broadcast %c0_i32_6 : i32 to vector<1x5x1xi32>
    %7 = arith.cmpi eq, %5, %6 : vector<1x5x1xi32>
    %c3_i32 = arith.constant 3 : i32
    %8 = vector.broadcast %c3_i32 : i32 to vector<1x5x1xi32>
    %9 = arith.cmpi eq, %5, %8 : vector<1x5x1xi32>
    %c4_i32 = arith.constant 4 : i32
    %10 = vector.broadcast %c4_i32 : i32 to vector<1x5x1xi32>
    %11 = arith.cmpi eq, %5, %10 : vector<1x5x1xi32>
    %cst = arith.constant 4.000000e+00 : f32
    %cst_7 = arith.constant 1.000000e+00 : f32
    %12 = vector.broadcast %cst : f32 to vector<1x5x1xf32>
    %13 = vector.broadcast %cst_7 : f32 to vector<1x5x1xf32>
    %14 = arith.select %11, %12, %13 : vector<1x5x1xi1>, vector<1x5x1xf32>
    %cst_8 = arith.constant 2.000000e+00 : f32
    %15 = vector.broadcast %cst_8 : f32 to vector<1x5x1xf32>
    %16 = arith.select %9, %15, %14 : vector<1x5x1xi1>, vector<1x5x1xf32>
    %cst_9 = arith.constant 0.000000e+00 : f32
    %17 = vector.broadcast %cst_9 : f32 to vector<1x5x1xf32>
    %18 = arith.select %7, %17, %16 : vector<1x5x1xi1>, vector<1x5x1xf32>
    %cst_10 = arith.constant 9.99999971E-10 : f32
    %19 = vector.broadcast %cst_10 : f32 to vector<2x5x128xf32>
    %20 = arith.addf %3, %19 : vector<2x5x128xf32>
    %21 = math.log %20 : vector<2x5x128xf32>
    %22 = arith.mulf %4, %21 : vector<2x5x128xf32>
    %cst_11 = arith.constant dense<0.000000e+00> : vector<2x128xf32>
    %23 = vector.multi_reduction <add>, %22, %cst_11 [1] : vector<2x5x128xf32> to vector<2x128xf32>
    %24 = vector.broadcast %18 : vector<1x5x1xf32> to vector<2x5x128xf32>
    %25 = arith.mulf %4, %24 : vector<2x5x128xf32>
    %cst_12 = arith.constant dense<0.000000e+00> : vector<2x128xf32>
    %26 = vector.multi_reduction <add>, %25, %cst_12 [1] : vector<2x5x128xf32> to vector<2x128xf32>
    %c0_13 = arith.constant 0 : index
    %c0_14 = arith.constant 0 : index
    %27 = vector.load %arg13[%c0_13, %c0_14] : memref<2x128xf32, #tpu.memory_space<vmem>>, vector<2x128xf32>
    %cst_15 = arith.constant 1.000000e+00 : f32
    %28 = vector.broadcast %cst_15 : f32 to vector<2x128xf32>
    %29 = arith.addf %26, %28 : vector<2x128xf32>
    %30 = arith.mulf %23, %29 : vector<2x128xf32>
    %31 = arith.addf %27, %30 : vector<2x128xf32>
    %c0_16 = arith.constant 0 : index
    %c0_17 = arith.constant 0 : index
    %32 = vector.load %arg13[%c0_16, %c0_17] : memref<2x128xf32, #tpu.memory_space<vmem>>, vector<2x128xf32>
    tpu.vector_store %arg13[%c0_16, %c0_17], %31 {strides = array<i32>} : memref<2x128xf32, #tpu.memory_space<vmem>>, vector<2x128xf32>,
    %c3_i32_18 = arith.constant 3 : i32
    %33 = arith.cmpi eq, %arg0, %c3_i32_18 : i32
    %34 = arith.extui %33 : i1 to i32
    %c0_i32_19 = arith.constant 0 : i32
    %35 = arith.cmpi ne, %34, %c0_i32_19 : i32
    scf.if %35 {
      %c0_20 = arith.constant 0 : index
      %c0_21 = arith.constant 0 : index
      %36 = vector.load %arg13[%c0_20, %c0_21] : memref<2x128xf32, #tpu.memory_space<vmem>>, vector<2x128xf32>
      %37 = vector.shape_cast %36 : vector<2x128xf32> to vector<1x2x128xf32>
      %cst_22 = arith.constant dense<0.000000e+00> : vector<1xf32>
      %38 = vector.multi_reduction <add>, %37, %cst_22 [1, 2] : vector<1x2x128xf32> to vector<1xf32>
      %39 = vector.shape_cast %38 : vector<1xf32> to vector<1x1x1xf32>
      %40 = vector.extract %39[0, 0, 0] : f32 from vector<1x1x1xf32>
      %cst_23 = arith.constant 0.000000e+00 : f32
      %41 = arith.subf %cst_23, %40 : f32
      %cst_24 = arith.constant 5.000000e-01 : f32
      %42 = arith.mulf %41, %cst_24 : f32
      %c0_25 = arith.constant 0 : index
      %43 = memref.load %arg14[%c0_25] : memref<4xf32, #tpu.memory_space<smem>>
      %c1 = arith.constant 1 : index
      %44 = memref.load %arg14[%c1] : memref<4xf32, #tpu.memory_space<smem>>
      %c2 = arith.constant 2 : index
      %45 = memref.load %arg14[%c2] : memref<4xf32, #tpu.memory_space<smem>>
      %46 = arith.addf %42, %43 : f32
      %47 = arith.addf %46, %44 : f32
      %48 = arith.addf %47, %45 : f32
      %c0_26 = arith.constant 0 : index
      %49 = memref.load %arg12[%c0_26] : memref<4xf32, #tpu.memory_space<smem>>
      memref.store %48, %arg12[%c0_26] : memref<4xf32, #tpu.memory_space<smem>>
      %c1_27 = arith.constant 1 : index
      %50 = memref.load %arg12[%c1_27] : memref<4xf32, #tpu.memory_space<smem>>
      memref.store %42, %arg12[%c1_27] : memref<4xf32, #tpu.memory_space<smem>>
      %c2_28 = arith.constant 2 : index
      %51 = memref.load %arg12[%c2_28] : memref<4xf32, #tpu.memory_space<smem>>
      memref.store %43, %arg12[%c2_28] : memref<4xf32, #tpu.memory_space<smem>>
      %c3 = arith.constant 3 : index
      %52 = memref.load %arg12[%c3] : memref<4xf32, #tpu.memory_space<smem>>
      memref.store %45, %arg12[%c3] : memref<4xf32, #tpu.memory_space<smem>>
    } else {
    }
    return
  }
  func.func @transform_0(%arg0: i32) -> (i32, i32, i32) {
    %c0_i32 = arith.constant 0 : i32
    %c0_i32_0 = arith.constant 0 : i32
    %c0_i32_1 = arith.constant 0 : i32
    return %c0_i32, %c0_i32_0, %arg0 : i32, i32, i32
  }
  func.func @transform_1(%arg0: i32) -> (i32, i32, i32) {
    %c0_i32 = arith.constant 0 : i32
    %c0_i32_0 = arith.constant 0 : i32
    %c0_i32_1 = arith.constant 0 : i32
    return %c0_i32, %c0_i32_0, %arg0 : i32, i32, i32
  }
  func.func @transform_2(%arg0: i32) -> (i32, i32) {
    %c0_i32 = arith.constant 0 : i32
    %c0_i32_0 = arith.constant 0 : i32
    %c0_i32_1 = arith.constant 0 : i32
    return %c0_i32, %c0_i32_0 : i32, i32
  }
  func.func @transform_3(%arg0: i32) -> (i32, i32) {
    %c0_i32 = arith.constant 0 : i32
    %c0_i32_0 = arith.constant 0 : i32
    %c0_i32_1 = arith.constant 0 : i32
    return %c0_i32, %c0_i32_0 : i32, i32
  }
  func.func @transform_4(%arg0: i32) -> (i32, i32) {
    %c0_i32 = arith.constant 0 : i32
    %c0_i32_0 = arith.constant 0 : i32
    %c0_i32_1 = arith.constant 0 : i32
    return %c0_i32, %c0_i32_0 : i32, i32
  }
  func.func @transform_5(%arg0: i32) -> (i32, i32) {
    %c0_i32 = arith.constant 0 : i32
    %c0_i32_0 = arith.constant 0 : i32
    %c0_i32_1 = arith.constant 0 : i32
    return %c0_i32, %c0_i32_0 : i32, i32
  }
  func.func @transform_6(%arg0: i32) -> (i32, i32) {
    %c0_i32 = arith.constant 0 : i32
    %c0_i32_0 = arith.constant 0 : i32
    %c0_i32_1 = arith.constant 0 : i32
    return %c0_i32, %c0_i32_0 : i32, i32
  }
  func.func @transform_7(%arg0: i32) -> (i32, i32) {
    %c0_i32 = arith.constant 0 : i32
    %c0_i32_0 = arith.constant 0 : i32
    %c0_i32_1 = arith.constant 0 : i32
    return %c0_i32, %c0_i32_0 : i32, i32
  }
  func.func @transform_8(%arg0: i32) -> (i32, i32) {
    %c0_i32 = arith.constant 0 : i32
    %c0_i32_0 = arith.constant 0 : i32
    %c0_i32_1 = arith.constant 0 : i32
    return %c0_i32, %c0_i32_0 : i32, i32
  }
  func.func @transform_9(%arg0: i32) -> (i32, i32) {
    %c0_i32 = arith.constant 0 : i32
    %c0_i32_0 = arith.constant 0 : i32
    %c0_i32_1 = arith.constant 0 : i32
    return %c0_i32, %c0_i32_0 : i32, i32
  }
  func.func @transform_10(%arg0: i32) -> (i32, i32) {
    %c0_i32 = arith.constant 0 : i32
    %c0_i32_0 = arith.constant 0 : i32
    %c0_i32_1 = arith.constant 0 : i32
    return %c0_i32, %c0_i32_0 : i32, i32
  }
  func.func @transform_11(%arg0: i32) -> i32 {
    %c0_i32 = arith.constant 0 : i32
    %c0_i32_0 = arith.constant 0 : i32
    return %c0_i32 : i32
  }
}

</mosaic_0001>

<llo_original>
// kernel: tpu_custom_call.1
$region0: #{tpu_custom_call.1}
  #allocation0 [shape = 'u32[]', space=smem, size = 0x4, offset = 0x4, fixed_abs, tag = 'smem constant byte address 0x4 - core index']
  #allocation1 [shape = 'u32[72,128]{1,0:T(1,128)}', space=vmem, size = 0x9000, scoped, tag = 'internal scratch']
  #allocation2 [shape = 'f32[2,128]{1,0:T(2,128)}', space=vmem, size = 0x400, scoped, tag = 'scratch operand']
  #allocation3 [shape = 'f32[4]{0:T(128)}', space=smem, size = 0x200, scoped, tag = 'scratch operand']
  %s0 = inlined_call_operand.vmem [shape: f32[2,5,512], index: 0, kind: input, shape index: {}]
  %s1 = inlined_call_operand.vmem [shape: f32[2,5,512], index: 1, kind: input, shape index: {}]
  %s2 = inlined_call_operand.vmem [shape: f32[8,16], index: 2, kind: input, shape index: {}]
  %s3 = inlined_call_operand.vmem [shape: s32[8,1], index: 3, kind: input, shape index: {}]
  %s4 = inlined_call_operand.vmem [shape: f32[8,1], index: 4, kind: input, shape index: {}]
  %s5 = inlined_call_operand.vmem [shape: f32[8,16], index: 5, kind: input, shape index: {}]
  %s6 = inlined_call_operand.vmem [shape: s32[8,1], index: 6, kind: input, shape index: {}]
  %s7 = inlined_call_operand.vmem [shape: f32[2,128], index: 7, kind: input, shape index: {}]
  %s8 = inlined_call_operand.vmem [shape: f32[2,128], index: 8, kind: input, shape index: {}]
  %s9 = inlined_call_operand.vmem [shape: f32[2,32], index: 9, kind: input, shape index: {}]
  %s10 = inlined_call_operand.vmem [shape: f32[2,32], index: 10, kind: input, shape index: {}]
  %s11 = inlined_call_operand.hbm [shape: f32[4], index: 11, kind: output, shape index: {}]
  %s12 = sld [smem:[#allocation0]]
  $region161: #{tpu_custom_call.1} parent=0
    _
  %s14 = ssub.s32 1, %s12
  %s15 = scalar_select 0, %s14, %s12
  $region1: #{tpu_custom_call.1} parent=0
    #allocation4 [shape = 'u8[16384]{0}', space=vmem, size = 0x4000, scoped, tag = 'input window, operand 0']
    #allocation5 [shape = 'u8[16384]{0}', space=vmem, size = 0x4000, scoped, tag = 'input window, operand 1']
    #allocation6 [shape = 'u8[512]{0}', space=smem, size = 0x200, scoped, tag = 'output window, operand 0, single buffered']
    #allocation7 [shape = 's32[2]{0}', space=sflag, size = 0x8, scoped, tag = 'scoped memory for tpu_custom_call.1']
    %16 = vsyncpa [#allocation7], 0
    loop: start=0, step=1, limit=6
    $region2: #{tpu_custom_call.1} parent=1 // loop_pre_header
      _
    $region3: #{tpu_custom_call.1} parent=1 // loop_header
      %s18 = sphi 0, %s22
      %p19 = scmp.ge.s32.totalorder %s18, 6
      %s28 = sphi 0, %s30
      %s31 = sphi 0, %s28
      %s32 = sphi 0, %s31
      %s48 = sphi 0, %s32
      %s54 = sphi 0, %s56
      %s57 = sphi 0, %s54
      %s58 = sphi 0, %s57
      %s74 = sphi 0, %s58
      %s78 = sphi 0, %s78
      %s80 = sphi 0, %s78
      %s81 = sphi 0, %s80
      %s95 = sphi 0, %s81
      %s99 = sphi 0, %s99
      %s101 = sphi 0, %s99
      %s102 = sphi 0, %s101
      %s116 = sphi 0, %s102
      %s120 = sphi 0, %s120
      %s122 = sphi 0, %s120
      %s123 = sphi 0, %s122
      %s137 = sphi 0, %s123
      %s141 = sphi 0, %s141
      %s143 = sphi 0, %s141
      %s144 = sphi 0, %s143
      %s158 = sphi 0, %s144
      %s162 = sphi 0, %s162
      %s164 = sphi 0, %s162
      %s165 = sphi 0, %s164
      %s179 = sphi 0, %s165
      %s183 = sphi 0, %s183
      %s185 = sphi 0, %s183
      %s186 = sphi 0, %s185
      %s200 = sphi 0, %s186
      %s204 = sphi 0, %s204
      %s206 = sphi 0, %s204
      %s207 = sphi 0, %s206
      %s221 = sphi 0, %s207
      %s225 = sphi 0, %s225
      %s227 = sphi 0, %s225
      %s228 = sphi 0, %s227
      %s242 = sphi 0, %s228
      %s246 = sphi 0, %s246
      %s248 = sphi 0, %s246
      %s249 = sphi 0, %s248
      %s263 = sphi 0, %s249
      %s267 = sphi 0, %s267
      %s269 = sphi 0, %s267
      %s270 = sphi 0, %s269
      %s284 = sphi 0, %s270
    $region4: #{tpu_custom_call.1} parent=1 // loop_header_branch
      %21 = sbr.rel (%p19) target = $region8
    $region5: #{tpu_custom_call.1} parent=1 // loop_body
      %s23 = ssub.s32 %s18, 1
      %s24 = ssub.s32 %s18, 2
      %s25 = sadd.s32 %s18, 1
      %s26 = ssub.s32 %s18, %s25
      %p27 = scmp.eq.s32.totalorder %s26, 0
      %s29 = sadd.s32 %s28, 1
      %s30 = scalar_select %p27, %s28, %s29
      %p33 = pneg %p27
      %p34 = scmp.eq.s32.totalorder %s18, 3
      %p35 = por %p33, %p34
      %p36 = scmp.ne.s32.totalorder %s28, %s31
      %p37 = scmp.eq.s32.totalorder %s18, 0
      %p38 = por %p36, %p37
      %p39 = scmp.ne.s32.totalorder %s28, %s31
      %p40 = scmp.eq.s32.totalorder %s23, 3
      %p41 = por %p39, %p40
      %p42 = scmp.ne.s32.totalorder %s31, %s32
      %p43 = scmp.eq.s32.totalorder %s23, 0
      %p44 = por %p42, %p43
      %p45 = scmp.ne.s32.totalorder %s31, %s32
      %p46 = scmp.eq.s32.totalorder %s24, 3
      %p47 = por %p45, %p46
      %p49 = scmp.ne.s32.totalorder %s32, %s48
      %p50 = scmp.eq.s32.totalorder %s24, 0
      %p51 = por %p49, %p50
      %s52 = ssub.s32 %s18, %s25
      %p53 = scmp.eq.s32.totalorder %s52, 0
      %s55 = sadd.s32 %s54, 1
      %s56 = scalar_select %p53, %s54, %s55
      %p59 = pneg %p53
      %p60 = scmp.eq.s32.totalorder %s18, 3
      %p61 = por %p59, %p60
      %p62 = scmp.ne.s32.totalorder %s54, %s57
      %p63 = scmp.eq.s32.totalorder %s18, 0
      %p64 = por %p62, %p63
      %p65 = scmp.ne.s32.totalorder %s54, %s57
      %p66 = scmp.eq.s32.totalorder %s23, 3
      %p67 = por %p65, %p66
      %p68 = scmp.ne.s32.totalorder %s57, %s58
      %p69 = scmp.eq.s32.totalorder %s23, 0
      %p70 = por %p68, %p69
      %p71 = scmp.ne.s32.totalorder %s57, %s58
      %p72 = scmp.eq.s32.totalorder %s24, 3
      %p73 = por %p71, %p72
      %p75 = scmp.ne.s32.totalorder %s58, %s74
      %p76 = scmp.eq.s32.totalorder %s24, 0
      %p77 = por %p75, %p76
      %s79 = sadd.s32 %s78, 1
      %p82 = scmp.eq.s32.totalorder %s18, 3
      %p83 = scmp.ne.s32.totalorder %s78, %s80
      %p84 = scmp.eq.s32.totalorder %s18, 0
      %p85 = por %p83, %p84
      %p86 = scmp.ne.s32.totalorder %s78, %s80
      %p87 = scmp.eq.s32.totalorder %s23, 3
      %p88 = por %p86, %p87
      %p89 = scmp.ne.s32.totalorder %s80, %s81
      %p90 = scmp.eq.s32.totalorder %s23, 0
      %p91 = por %p89, %p90
      %p92 = scmp.ne.s32.totalorder %s80, %s81
      %p93 = scmp.eq.s32.totalorder %s24, 3
      %p94 = por %p92, %p93
      %p96 = scmp.ne.s32.totalorder %s81, %s95
      %p97 = scmp.eq.s32.totalorder %s24, 0
      %p98 = por %p96, %p97
      %s100 = sadd.s32 %s99, 1
      %p103 = scmp.eq.s32.totalorder %s18, 3
      %p104 = scmp.ne.s32.totalorder %s99, %s101
      %p105 = scmp.eq.s32.totalorder %s18, 0
      %p106 = por %p104, %p105
      %p107 = scmp.ne.s32.totalorder %s99, %s101
      %p108 = scmp.eq.s32.totalorder %s23, 3
      %p109 = por %p107, %p108
      %p110 = scmp.ne.s32.totalorder %s101, %s102
      %p111 = scmp.eq.s32.totalorder %s23, 0
      %p112 = por %p110, %p111
      %p113 = scmp.ne.s32.totalorder %s101, %s102
      %p114 = scmp.eq.s32.totalorder %s24, 3
      %p115 = por %p113, %p114
      %p117 = scmp.ne.s32.totalorder %s102, %s116
      %p118 = scmp.eq.s32.totalorder %s24, 0
      %p119 = por %p117, %p118
      %s121 = sadd.s32 %s120, 1
      %p124 = scmp.eq.s32.totalorder %s18, 3
      %p125 = scmp.ne.s32.totalorder %s120, %s122
      %p126 = scmp.eq.s32.totalorder %s18, 0
      %p127 = por %p125, %p126
      %p128 = scmp.ne.s32.totalorder %s120, %s122
      %p129 = scmp.eq.s32.totalorder %s23, 3
      %p130 = por %p128, %p129
      %p131 = scmp.ne.s32.totalorder %s122, %s123
      %p132 = scmp.eq.s32.totalorder %s23, 0
      %p133 = por %p131, %p132
      %p134 = scmp.ne.s32.totalorder %s122, %s123
      %p135 = scmp.eq.s32.totalorder %s24, 3
      %p136 = por %p134, %p135
      %p138 = scmp.ne.s32.totalorder %s123, %s137
      %p139 = scmp.eq.s32.totalorder %s24, 0
      %p140 = por %p138, %p139
      %s142 = sadd.s32 %s141, 1
      %p145 = scmp.eq.s32.totalorder %s18, 3
      %p146 = scmp.ne.s32.totalorder %s141, %s143
      %p147 = scmp.eq.s32.totalorder %s18, 0
      %p148 = por %p146, %p147
      %p149 = scmp.ne.s32.totalorder %s141, %s143
      %p150 = scmp.eq.s32.totalorder %s23, 3
      %p151 = por %p149, %p150
      %p152 = scmp.ne.s32.totalorder %s143, %s144
      %p153 = scmp.eq.s32.totalorder %s23, 0
      %p154 = por %p152, %p153
      %p155 = scmp.ne.s32.totalorder %s143, %s144
      %p156 = scmp.eq.s32.totalorder %s24, 3
      %p157 = por %p155, %p156
      %p159 = scmp.ne.s32.totalorder %s144, %s158
      %p160 = scmp.eq.s32.totalorder %s24, 0
      %p161 = por %p159, %p160
      %s163 = sadd.s32 %s162, 1
      %p166 = scmp.eq.s32.totalorder %s18, 3
      %p167 = scmp.ne.s32.totalorder %s162, %s164
      %p168 = scmp.eq.s32.totalorder %s18, 0
      %p169 = por %p167, %p168
      %p170 = scmp.ne.s32.totalorder %s162, %s164
      %p171 = scmp.eq.s32.totalorder %s23, 3
      %p172 = por %p170, %p171
      %p173 = scmp.ne.s32.totalorder %s164, %s165
      %p174 = scmp.eq.s32.totalorder %s23, 0
      %p175 = por %p173, %p174
      %p176 = scmp.ne.s32.totalorder %s164, %s165
      %p177 = scmp.eq.s32.totalorder %s24, 3
      %p178 = por %p176, %p177
      %p180 = scmp.ne.s32.totalorder %s165, %s179
      %p181 = scmp.eq.s32.totalorder %s24, 0
      %p182 = por %p180, %p181
      %s184 = sadd.s32 %s183, 1
      %p187 = scmp.eq.s32.totalorder %s18, 3
      %p188 = scmp.ne.s32.totalorder %s183, %s185
      %p189 = scmp.eq.s32.totalorder %s18, 0
      %p190 = por %p188, %p189
      %p191 = scmp.ne.s32.totalorder %s183, %s185
      %p192 = scmp.eq.s32.totalorder %s23, 3
      %p193 = por %p191, %p192
      %p194 = scmp.ne.s32.totalorder %s185, %s186
      %p195 = scmp.eq.s32.totalorder %s23, 0
      %p196 = por %p194, %p195
      %p197 = scmp.ne.s32.totalorder %s185, %s186
      %p198 = scmp.eq.s32.totalorder %s24, 3
      %p199 = por %p197, %p198
      %p201 = scmp.ne.s32.totalorder %s186, %s200
      %p202 = scmp.eq.s32.totalorder %s24, 0
      %p203 = por %p201, %p202
      %s205 = sadd.s32 %s204, 1
      %p208 = scmp.eq.s32.totalorder %s18, 3
      %p209 = scmp.ne.s32.totalorder %s204, %s206
      %p210 = scmp.eq.s32.totalorder %s18, 0
      %p211 = por %p209, %p210
      %p212 = scmp.ne.s32.totalorder %s204, %s206
      %p213 = scmp.eq.s32.totalorder %s23, 3
      %p214 = por %p212, %p213
      %p215 = scmp.ne.s32.totalorder %s206, %s207
      %p216 = scmp.eq.s32.totalorder %s23, 0
      %p217 = por %p215, %p216
      %p218 = scmp.ne.s32.totalorder %s206, %s207
      %p219 = scmp.eq.s32.totalorder %s24, 3
      %p220 = por %p218, %p219
      %p222 = scmp.ne.s32.totalorder %s207, %s221
      %p223 = scmp.eq.s32.totalorder %s24, 0
      %p224 = por %p222, %p223
      %s226 = sadd.s32 %s225, 1
      %p229 = scmp.eq.s32.totalorder %s18, 3
      %p230 = scmp.ne.s32.totalorder %s225, %s227
      %p231 = scmp.eq.s32.totalorder %s18, 0
      %p232 = por %p230, %p231
      %p233 = scmp.ne.s32.totalorder %s225, %s227
      %p234 = scmp.eq.s32.totalorder %s23, 3
      %p235 = por %p233, %p234
      %p236 = scmp.ne.s32.totalorder %s227, %s228
      %p237 = scmp.eq.s32.totalorder %s23, 0
      %p238 = por %p236, %p237
      %p239 = scmp.ne.s32.totalorder %s227, %s228
      %p240 = scmp.eq.s32.totalorder %s24, 3
      %p241 = por %p239, %p240
      %p243 = scmp.ne.s32.totalorder %s228, %s242
      %p244 = scmp.eq.s32.totalorder %s24, 0
      %p245 = por %p243, %p244
      %s247 = sadd.s32 %s246, 1
      %p250 = scmp.eq.s32.totalorder %s18, 3
      %p251 = scmp.ne.s32.totalorder %s246, %s248
      %p252 = scmp.eq.s32.totalorder %s18, 0
      %p253 = por %p251, %p252
      %p254 = scmp.ne.s32.totalorder %s246, %s248
      %p255 = scmp.eq.s32.totalorder %s23, 3
      %p256 = por %p254, %p255
      %p257 = scmp.ne.s32.totalorder %s248, %s249
      %p258 = scmp.eq.s32.totalorder %s23, 0
      %p259 = por %p257, %p258
      %p260 = scmp.ne.s32.totalorder %s248, %s249
      %p261 = scmp.eq.s32.totalorder %s24, 3
      %p262 = por %p260, %p261
      %p264 = scmp.ne.s32.totalorder %s249, %s263
      %p265 = scmp.eq.s32.totalorder %s24, 0
      %p266 = por %p264, %p265
      %s268 = sadd.s32 %s267, 1
      %p271 = scmp.eq.s32.totalorder %s18, 3
      %p272 = scmp.ne.s32.totalorder %s267, %s269
      %p273 = scmp.eq.s32.totalorder %s18, 0
      %p274 = por %p272, %p273
      %p275 = scmp.ne.s32.totalorder %s267, %s269
      %p276 = scmp.eq.s32.totalorder %s23, 3
      %p277 = por %p275, %p276
      %p278 = scmp.ne.s32.totalorder %s269, %s270
      %p279 = scmp.eq.s32.totalorder %s23, 0
      %p280 = por %p278, %p279
      %p281 = scmp.ne.s32.totalorder %s269, %s270
      %p282 = scmp.eq.s32.totalorder %s24, 3
      %p283 = por %p281, %p282
      %p285 = scmp.ne.s32.totalorder %s270, %s284
      %p286 = scmp.eq.s32.totalorder %s24, 0
      %p287 = por %p285, %p286
      %p288 = scmp.le.s32.totalorder 1, %s18
      %p289 = scmp.lt.s32.totalorder %s18, 5
      %p290 = pnand %p288, %p289
      %p291 = pneg %p290
      // Predicated region
      $region9: #{tpu_custom_call.1} parent=5 // pred_check
        _
      $region10: #{tpu_custom_call.1} parent=5 // pred_check_branch
        %293 = sbr.rel (%p290) target = $region12
      $region11: #{tpu_custom_call.1} parent=5 // pred_region
        %s294 = ssub.s32 %s18, 1
        // Predicated region
        $region13: #{tpu_custom_call.1} parent=11 // pred_check
          %p295 = pneg %p91
        $region14: #{tpu_custom_call.1} parent=11 // pred_check_branch
          %297 = sbr.rel (%p295) target = $region16
        $region15: #{tpu_custom_call.1} parent=11 // pred_region
          _
        $region16: #{tpu_custom_call.1} parent=11 // pred_fallthru
          _
        // Predicated region
        $region17: #{tpu_custom_call.1} parent=11 // pred_check
          %p298 = pneg %p112
        $region18: #{tpu_custom_call.1} parent=11 // pred_check_branch
          %300 = sbr.rel (%p298) target = $region20
        $region19: #{tpu_custom_call.1} parent=11 // pred_region
          _
        $region20: #{tpu_custom_call.1} parent=11 // pred_fallthru
          _
        // Predicated region
        $region21: #{tpu_custom_call.1} parent=11 // pred_check
          %p301 = pneg %p133
        $region22: #{tpu_custom_call.1} parent=11 // pred_check_branch
          %303 = sbr.rel (%p301) target = $region24
        $region23: #{tpu_custom_call.1} parent=11 // pred_region
          _
        $region24: #{tpu_custom_call.1} parent=11 // pred_fallthru
          _
        // Predicated region
        $region25: #{tpu_custom_call.1} parent=11 // pred_check
          %p304 = pneg %p154
        $region26: #{tpu_custom_call.1} parent=11 // pred_check_branch
          %306 = sbr.rel (%p304) target = $region28
        $region27: #{tpu_custom_call.1} parent=11 // pred_region
          _
        $region28: #{tpu_custom_call.1} parent=11 // pred_fallthru
          _
        // Predicated region
        $region29: #{tpu_custom_call.1} parent=11 // pred_check
          %p307 = pneg %p175
        $region30: #{tpu_custom_call.1} parent=11 // pred_check_branch
          %309 = sbr.rel (%p307) target = $region32
        $region31: #{tpu_custom_call.1} parent=11 // pred_region
          _
        $region32: #{tpu_custom_call.1} parent=11 // pred_fallthru
          _
        // Predicated region
        $region33: #{tpu_custom_call.1} parent=11 // pred_check
          %p310 = pneg %p196
        $region34: #{tpu_custom_call.1} parent=11 // pred_check_branch
          %312 = sbr.rel (%p310) target = $region36
        $region35: #{tpu_custom_call.1} parent=11 // pred_region
          _
        $region36: #{tpu_custom_call.1} parent=11 // pred_fallthru
          _
        // Predicated region
        $region37: #{tpu_custom_call.1} parent=11 // pred_check
          %p313 = pneg %p217
        $region38: #{tpu_custom_call.1} parent=11 // pred_check_branch
          %315 = sbr.rel (%p313) target = $region40
        $region39: #{tpu_custom_call.1} parent=11 // pred_region
          _
        $region40: #{tpu_custom_call.1} parent=11 // pred_fallthru
          _
        // Predicated region
        $region41: #{tpu_custom_call.1} parent=11 // pred_check
          %p316 = pneg %p238
        $region42: #{tpu_custom_call.1} parent=11 // pred_check_branch
          %318 = sbr.rel (%p316) target = $region44
        $region43: #{tpu_custom_call.1} parent=11 // pred_region
          _
        $region44: #{tpu_custom_call.1} parent=11 // pred_fallthru
          _
        // Predicated region
        $region45: #{tpu_custom_call.1} parent=11 // pred_check
          %p319 = pneg %p259
        $region46: #{tpu_custom_call.1} parent=11 // pred_check_branch
          %321 = sbr.rel (%p319) target = $region48
        $region47: #{tpu_custom_call.1} parent=11 // pred_region
          _
        $region48: #{tpu_custom_call.1} parent=11 // pred_fallthru
          _
      $region12: #{tpu_custom_call.1} parent=5 // pred_fallthru
        _
      %p322 = scmp.lt.s32.totalorder %s18, 4
      // Predicated region
      $region49: #{tpu_custom_call.1} parent=5 // pred_check
        %p323 = pneg %p322
      $region50: #{tpu_custom_call.1} parent=5 // pred_check_branch
        %325 = sbr.rel (%p323) target = $region52
      $region51: #{tpu_custom_call.1} parent=5 // pred_region
        // Predicated region
        $region53: #{tpu_custom_call.1} parent=51 // pred_check
          %p326 = pneg %p38
        $region54: #{tpu_custom_call.1} parent=51 // pred_check_branch
          %328 = sbr.rel (%p326) target = $region56
        $region55: #{tpu_custom_call.1} parent=51 // pred_region
          %s329 = sand.u32 %s28, 1
          %s330 = sand.u32 %s28, 1
          %s331 = smul.addr %s330, 16
          %s332 = scalar_lea.vmem [#allocation4], %s331
          %s333 = smul.addr %s18, 8
          %s334 = scalar_lea.vmem %s0, %s333
          // Predicated region
          $region57: #{tpu_custom_call.1} parent=55 // pred_check
            _
          $region58: #{tpu_custom_call.1} parent=55 // pred_check_branch
            %336 = sbr.rel (0) target = $region60
          $region59: #{tpu_custom_call.1} parent=55 // pred_region
            // Predicated region
            $region61: #{tpu_custom_call.1} parent=59 // pred_check
              _
            $region62: #{tpu_custom_call.1} parent=59 // pred_check_branch
              %338 = sbr.rel (0) target = $region64
            $region63: #{tpu_custom_call.1} parent=59 // pred_region
              // Predicated region
              $region76: #{tpu_custom_call.1} parent=63 // pred_check
                _
              $region77: #{tpu_custom_call.1} parent=63 // pred_check_branch
                %356 = sbr.rel (0) target = $region79
              $region78: #{tpu_custom_call.1} parent=63 // pred_region
                loop: start=0, step=1, limit=1
                $region80: #{tpu_custom_call.1} parent=78 // loop_pre_header
                  _
                $region81: #{tpu_custom_call.1} parent=78 // loop_header
                  %s358 = sphi 0, %s362
                  %p359 = scmp.ge.s32.totalorder %s358, 1
                  %s363 = sphi %s334, %s334
                  %s364 = sphi %s332, %s332
                $region82: #{tpu_custom_call.1} parent=78 // loop_header_branch
                  %361 = sbr.rel (%p359) target = $region86
                $region83: #{tpu_custom_call.1} parent=78 // loop_body
                  %v365 = vld [vmem:[%s363] sm:$0xff]
                  %366 = vst [vmem:[%s364] sm:$0xff] %v365
                  %v367 = vld [vmem:[%s363 + $0x20] sm:$0xff]
                  %368 = vst [vmem:[%s364 + $0x8] sm:$0xff] %v367
                $region84: #{tpu_custom_call.1} parent=78 // loop_footer
                  %s362 = sadd.s32 1, %s358
                $region85: #{tpu_custom_call.1} parent=78 // loop_footer_branch
                  %357 = sbr.rel target = $region81
                $region86: #{tpu_custom_call.1} parent=78 // loop_exit
                  _
              $region79: #{tpu_custom_call.1} parent=63 // pred_fallthru
                _
              // Predicated region
              $region87: #{tpu_custom_call.1} parent=63 // pred_check
                _
              $region88: #{tpu_custom_call.1} parent=63 // pred_check_branch
                %370 = sbr.rel target = $region90
              $region89: #{tpu_custom_call.1} parent=63 // pred_region
                _
              $region90: #{tpu_custom_call.1} parent=63 // pred_fallthru
                _
            $region64: #{tpu_custom_call.1} parent=59 // pred_fallthru
              _
            // Predicated region
            $region65: #{tpu_custom_call.1} parent=59 // pred_check
              _
            $region66: #{tpu_custom_call.1} parent=59 // pred_check_branch
              %340 = sbr.rel target = $region68
            $region67: #{tpu_custom_call.1} parent=59 // pred_region
              %s342 = ssub.s32 256, 1
              loop: start=0, step=1, limit=1
              $region69: #{tpu_custom_call.1} parent=67 // loop_pre_header
                _
              $region70: #{tpu_custom_call.1} parent=67 // loop_header
                %s344 = sphi 0, %s348
                %p345 = scmp.ge.s32.totalorder %s344, 1
                %s349 = sphi %s334, %s334
                %s350 = sphi %s332, %s332
              $region71: #{tpu_custom_call.1} parent=67 // loop_header_branch
                %347 = sbr.rel (%p345) target = $region75
              $region72: #{tpu_custom_call.1} parent=67 // loop_body
                %v351 = vld [vmem:[%s349] sm:%s342]
                %352 = vst [vmem:[%s350] sm:%s342] %v351
                %v353 = vld [vmem:[%s349 + $0x20] sm:%s342]
                %354 = vst [vmem:[%s350 + $0x8] sm:%s342] %v353
              $region73: #{tpu_custom_call.1} parent=67 // loop_footer
                %s348 = sadd.s32 1, %s344
              $region74: #{tpu_custom_call.1} parent=67 // loop_footer_branch
                %343 = sbr.rel target = $region70
              $region75: #{tpu_custom_call.1} parent=67 // loop_exit
                _
            $region68: #{tpu_custom_call.1} parent=59 // pred_fallthru
              _
          $region60: #{tpu_custom_call.1} parent=55 // pred_fallthru
            _
          %371 = vnop
        $region56: #{tpu_custom_call.1} parent=51 // pred_fallthru
          _
        // Predicated region
        $region91: #{tpu_custom_call.1} parent=51 // pred_check
          %p372 = pneg %p64
        $region92: #{tpu_custom_call.1} parent=51 // pred_check_branch
          %374 = sbr.rel (%p372) target = $region94
        $region93: #{tpu_custom_call.1} parent=51 // pred_region
          %s375 = sand.u32 %s54, 1
          %s376 = sand.u32 %s54, 1
          %s377 = smul.addr %s376, 16
          %s378 = scalar_lea.vmem [#allocation5], %s377
          %s379 = smul.addr %s18, 8
          %s380 = scalar_lea.vmem %s1, %s379
          // Predicated region
          $region95: #{tpu_custom_call.1} parent=93 // pred_check
            _
          $region96: #{tpu_custom_call.1} parent=93 // pred_check_branch
            %382 = sbr.rel (0) target = $region98
          $region97: #{tpu_custom_call.1} parent=93 // pred_region
            // Predicated region
            $region99: #{tpu_custom_call.1} parent=97 // pred_check
              _
            $region100: #{tpu_custom_call.1} parent=97 // pred_check_branch
              %384 = sbr.rel (0) target = $region102
            $region101: #{tpu_custom_call.1} parent=97 // pred_region
              // Predicated region
              $region114: #{tpu_custom_call.1} parent=101 // pred_check
                _
              $region115: #{tpu_custom_call.1} parent=101 // pred_check_branch
                %402 = sbr.rel (0) target = $region117
              $region116: #{tpu_custom_call.1} parent=101 // pred_region
                loop: start=0, step=1, limit=1
                $region118: #{tpu_custom_call.1} parent=116 // loop_pre_header
                  _
                $region119: #{tpu_custom_call.1} parent=116 // loop_header
                  %s404 = sphi 0, %s408
                  %p405 = scmp.ge.s32.totalorder %s404, 1
                  %s409 = sphi %s380, %s380
                  %s410 = sphi %s378, %s378
                $region120: #{tpu_custom_call.1} parent=116 // loop_header_branch
                  %407 = sbr.rel (%p405) target = $region124
                $region121: #{tpu_custom_call.1} parent=116 // loop_body
                  %v411 = vld [vmem:[%s409] sm:$0xff]
                  %412 = vst [vmem:[%s410] sm:$0xff] %v411
                  %v413 = vld [vmem:[%s409 + $0x20] sm:$0xff]
                  %414 = vst [vmem:[%s410 + $0x8] sm:$0xff] %v413
                $region122: #{tpu_custom_call.1} parent=116 // loop_footer
                  %s408 = sadd.s32 1, %s404
                $region123: #{tpu_custom_call.1} parent=116 // loop_footer_branch
                  %403 = sbr.rel target = $region119
                $region124: #{tpu_custom_call.1} parent=116 // loop_exit
                  _
              $region117: #{tpu_custom_call.1} parent=101 // pred_fallthru
                _
              // Predicated region
              $region125: #{tpu_custom_call.1} parent=101 // pred_check
                _
              $region126: #{tpu_custom_call.1} parent=101 // pred_check_branch
                %416 = sbr.rel target = $region128
              $region127: #{tpu_custom_call.1} parent=101 // pred_region
                _
              $region128: #{tpu_custom_call.1} parent=101 // pred_fallthru
                _
            $region102: #{tpu_custom_call.1} parent=97 // pred_fallthru
              _
            // Predicated region
            $region103: #{tpu_custom_call.1} parent=97 // pred_check
              _
            $region104: #{tpu_custom_call.1} parent=97 // pred_check_branch
              %386 = sbr.rel target = $region106
            $region105: #{tpu_custom_call.1} parent=97 // pred_region
              %s388 = ssub.s32 256, 1
              loop: start=0, step=1, limit=1
              $region107: #{tpu_custom_call.1} parent=105 // loop_pre_header
                _
              $region108: #{tpu_custom_call.1} parent=105 // loop_header
                %s390 = sphi 0, %s394
                %p391 = scmp.ge.s32.totalorder %s390, 1
                %s395 = sphi %s380, %s380
                %s396 = sphi %s378, %s378
              $region109: #{tpu_custom_call.1} parent=105 // loop_header_branch
                %393 = sbr.rel (%p391) target = $region113
              $region110: #{tpu_custom_call.1} parent=105 // loop_body
                %v397 = vld [vmem:[%s395] sm:%s388]
                %398 = vst [vmem:[%s396] sm:%s388] %v397
                %v399 = vld [vmem:[%s395 + $0x20] sm:%s388]
                %400 = vst [vmem:[%s396 + $0x8] sm:%s388] %v399
              $region111: #{tpu_custom_call.1} parent=105 // loop_footer
                %s394 = sadd.s32 1, %s390
              $region112: #{tpu_custom_call.1} parent=105 // loop_footer_branch
                %389 = sbr.rel target = $region108
              $region113: #{tpu_custom_call.1} parent=105 // loop_exit
                _
            $region106: #{tpu_custom_call.1} parent=97 // pred_fallthru
              _
          $region98: #{tpu_custom_call.1} parent=93 // pred_fallthru
            _
          %417 = vnop
        $region94: #{tpu_custom_call.1} parent=51 // pred_fallthru
          _
      $region52: #{tpu_custom_call.1} parent=5 // pred_fallthru
        _
      %p418 = scmp.le.s32.totalorder 1, %s18
      %p419 = scmp.lt.s32.totalorder %s18, 5
      %p420 = pnand %p418, %p419
      %p421 = pneg %p420
      // Predicated region
      $region129: #{tpu_custom_call.1} parent=5 // pred_check
        _
      $region130: #{tpu_custom_call.1} parent=5 // pred_check_branch
        %423 = sbr.rel (%p420) target = $region132
      $region131: #{tpu_custom_call.1} parent=5 // pred_region
        %s424 = ssub.s32 %s18, 1
        %s425 = sand.u32 %s31, 1
        %s426 = sand.u32 %s31, 1
        %s427 = smul.addr %s426, 16
        %s428 = scalar_lea.vmem [#allocation4], %s427
        // Predicated region
        $region133: #{tpu_custom_call.1} parent=131 // pred_check
          %p429 = pneg %p44
        $region134: #{tpu_custom_call.1} parent=131 // pred_check_branch
          %431 = sbr.rel (%p429) target = $region136
        $region135: #{tpu_custom_call.1} parent=131 // pred_region
          _
        $region136: #{tpu_custom_call.1} parent=131 // pred_fallthru
          _
        %s432 = sand.u32 %s57, 1
        %s433 = sand.u32 %s57, 1
        %s434 = smul.addr %s433, 16
        %s435 = scalar_lea.vmem [#allocation5], %s434
        // Predicated region
        $region137: #{tpu_custom_call.1} parent=131 // pred_check
          %p436 = pneg %p70
        $region138: #{tpu_custom_call.1} parent=131 // pred_check_branch
          %438 = sbr.rel (%p436) target = $region140
        $region139: #{tpu_custom_call.1} parent=131 // pred_region
          _
        $region140: #{tpu_custom_call.1} parent=131 // pred_fallthru
          _
        %s439 = sand.u32 %s31, 1
        %s440 = sand.u32 %s31, 1
        %s441 = smul.addr %s440, 16
        %s442 = scalar_lea.vmem [#allocation4], %s441
        %p443 = pneg %p44
        %p444 = pneg %p41
        %s445 = sand.u32 %s57, 1
        %s446 = sand.u32 %s57, 1
        %s447 = smul.addr %s446, 16
        %s448 = scalar_lea.vmem [#allocation5], %s447
        %p449 = pneg %p70
        %p450 = pneg %p67
        %p451 = pneg %p91
        %p452 = pneg %p88
        %p453 = pneg %p112
        %p454 = pneg %p109
        %p455 = pneg %p133
        %p456 = pneg %p130
        %p457 = pneg %p154
        %p458 = pneg %p151
        %p459 = pneg %p175
        %p460 = pneg %p172
        %p461 = pneg %p196
        %p462 = pneg %p193
        %p463 = pneg %p217
        %p464 = pneg %p214
        %p465 = pneg %p238
        %p466 = pneg %p235
        %p467 = pneg %p259
        %p468 = pneg %p256
        %p469 = pneg %p280
        %p470 = pneg %p277
        %p471 = scmp.eq.s32.totalorder %s23, 0
        // Predicated region
        $region141: #{tpu_custom_call.1} parent=131 // pred_check
          %p472 = pneg %p471
        $region142: #{tpu_custom_call.1} parent=131 // pred_check_branch
          %474 = sbr.rel (%p472) target = $region144
        $region143: #{tpu_custom_call.1} parent=131 // pred_region
          %475 = vst [vmem:[#allocation2] sm:$0x3] 0.0
          %v476 = vld [vmem:[%s2] sm:$0xff]
          %v477 = vld [vmem:[%s3] sm:$0xff]
          %v478 = vld [vmem:[%s4] sm:$0xff]
          %vm479 = vcmask 130048
          %v480 = vsel %vm479, %v476, -inf
          %481 = vmax.xlane.f32.xlu0 %v480
          %v482 = vpop.xlane.xlu0 %481
          %v483 = vsub.f32 %v476, %v482
          %v484 = vmul.f32 %v483, 1.442695
          %v485 = vpow.pop %v484
          %v486 = vsel %vm479, %v485, 0.0
          %487 = vadd.xlane.f32.xlu0 %v486
          %v488 = vpop.xlane.xlu0 %487
          %v489 = vlog2.pop %v488
          %v490 = vmul.f32 %v489, 0.6931472
          %v491 = vadd.f32 %v482, %v490
          %v492 = vlaneseq
          %v493 = vand.u32 %v492, 127
          %494 = vset.pattern.permute.xlu0 0
          %495 = vperm.xlu0 %494, %v477
          %v496 = vpop.permute.xlu0 %495
          %vm497 = vcmp.eq.s32.totalorder %v493, %v496
          %v498 = vsel %vm497, %v476, 0.0
          %v499 = vsel %vm479, %v498, 0.0
          %500 = vadd.xlane.f32.xlu0 %v499
          %v501 = vpop.xlane.xlu0 %500
          %v502 = vsub.f32 %v491, %v501
          %v503 = vmul.f32 %v502, %v478
          %vm504 = vcmask 7168
          %v505 = vsel %vm504, %v503, 0.0
          %506 = vadd.xlane.f32.xlu0 %v505
          %v507 = vpop.xlane.xlu0 %506
          %v508 = vrot.slane %v507, 4
          %v509 = vadd.f32 %v507, %v508
          %v510 = vrot.slane %v509, 2
          %v511 = vadd.f32 %v509, %v510
          %v512 = vrot.slane %v511, 1
          %v513 = vadd.f32 %v511, %v512
          %s514 = vtos %v513
          %v515 = vld [vmem:[%s5] sm:$0xff]
          %v516 = vld [vmem:[%s6] sm:$0xff]
          %v517 = vsel %vm479, %v515, -inf
          %518 = vmax.xlane.f32.xlu0 %v517
          %v519 = vpop.xlane.xlu0 %518
          %v520 = vsub.f32 %v515, %v519
          %v521 = vmul.f32 %v520, 1.442695
          %v522 = vpow.pop %v521
          %v523 = vsel %vm479, %v522, 0.0
          %524 = vadd.xlane.f32.xlu0 %v523
          %v525 = vpop.xlane.xlu0 %524
          %v526 = vlog2.pop %v525
          %v527 = vmul.f32 %v526, 0.6931472
          %v528 = vadd.f32 %v519, %v527
          %529 = vset.pattern.permute.xlu0 0
          %530 = vperm.xlu0 %529, %v516
          %v531 = vpop.permute.xlu0 %530
          %vm532 = vcmp.eq.s32.totalorder %v493, %v531
          %v533 = vsel %vm532, %v515, 0.0
          %v534 = vsel %vm479, %v533, 0.0
          %535 = vadd.xlane.f32.xlu0 %v534
          %v536 = vpop.xlane.xlu0 %535
          %v537 = vsub.f32 %v528, %v536
          %v538 = vsel %vm504, %v537, 0.0
          %539 = vadd.xlane.f32.xlu0 %v538
          %v540 = vpop.xlane.xlu0 %539
          %v541 = vrot.slane %v540, 4
          %v542 = vadd.f32 %v540, %v541
          %v543 = vrot.slane %v542, 2
          %v544 = vadd.f32 %v542, %v543
          %v545 = vrot.slane %v544, 1
          %v546 = vadd.f32 %v544, %v545
          %s547 = vtos %v546
          %s548 = smul.f32 %s547, 0.078125
          %v549 = vld [vmem:[%s7] sm:$0x3]
          %v550 = vld [vmem:[%s8] sm:$0x3]
          %v551 = vsub.f32 %v549, %v550
          %v552 = vmul.f32 %v551, %v551
          %vm553 = vcmask 1041408
          %v554 = vsel %vm553, %v552, 0.0
          %555 = vadd.xlane.f32.xlu0 %v554
          %v556 = vpop.xlane.xlu0 %555
          %v557 = vrot.slane %v556, 4
          %v558 = vadd.f32 %v556, %v557
          %v559 = vrot.slane %v558, 2
          %v560 = vadd.f32 %v558, %v559
          %v561 = vrot.slane %v560, 1
          %v562 = vadd.f32 %v560, %v561
          %s563 = vtos %v562
          %s564 = smul.f32 %s563, 0.005
          %v565 = vld [vmem:[%s9] sm:$0x3]
          %v566 = vld [vmem:[%s10] sm:$0x3]
          %v567 = vsub.f32 -1.0, %v566
          %v568 = vmul.f32 %v565, %v565
          %v569 = vadd.f32 %v567, %v568
          %v570 = vmul.f32 %v566, 1.442695
          %v571 = vpow.pop %v570
          %v572 = vadd.f32 %v569, %v571
          %vm573 = vcmask 254976
          %v574 = vsel %vm573, %v572, 0.0
          %575 = vadd.xlane.f32.xlu0 %v574
          %v576 = vpop.xlane.xlu0 %575
          %v577 = vrot.slane %v576, 4
          %v578 = vadd.f32 %v576, %v577
          %v579 = vrot.slane %v578, 2
          %v580 = vadd.f32 %v578, %v579
          %v581 = vrot.slane %v580, 1
          %v582 = vadd.f32 %v580, %v581
          %s583 = vtos %v582
          %s584 = smul.f32 %s583, 0.005
          %s585 = smul.f32 %s584, 0.01
          %s586 = sadd.f32 %s564, %s585
          %s587 = scalar_lea.smem [#allocation3], 0
          %588 = sst [smem:[%s587]] %s514
          %s589 = scalar_lea.smem [#allocation3], 1
          %590 = sst [smem:[%s589]] %s548
          %s591 = scalar_lea.smem [#allocation3], 2
          %592 = sst [smem:[%s591]] %s586
        $region144: #{tpu_custom_call.1} parent=131 // pred_fallthru
          _
        %v593 = vld [vmem:[%s428] sm:$0x1f]
        %v594 = vld [vmem:[%s428 + $0x8] sm:$0x1f]
        %v595 = vld [vmem:[%s435] sm:$0x1f]
        %v596 = vld [vmem:[%s435 + $0x8] sm:$0x1f]
        %v597 = vlaneseq
        %v598 = vshrl.u32 %v597, 7
        %vm599 = vcmp.eq.s32.totalorder %v598, 0
        %vm600 = vcmp.eq.s32.totalorder %v598, 3
        %vm601 = vcmp.eq.s32.totalorder %v598, 4
        %v602 = vsel %vm601, 4.0, 1.0
        %v603 = vsel %vm600, 2.0, %v602
        %v604 = vsel %vm599, 0.0, %v603
        %v605 = vadd.f32 %v593, 1e-09
        %v606 = vadd.f32 %v594, 1e-09
        %v607 = vlog2.pop %v605
        %v608 = vmul.f32 %v607, 0.6931472
        %v609 = vlog2.pop %v606
        %v610 = vmul.f32 %v609, 0.6931472
        %v611 = vmul.f32 %v595, %v608
        %v612 = vmul.f32 %v596, %v610
        %vm613 = vcmask 1044480
        %v614 = vsel %vm613, %v611, 0.0
        %v615 = vrot.slane %v614, 4
        %v616 = vadd.f32 %v614, %v615
        %v617 = vrot.slane %v616, 2
        %v618 = vadd.f32 %v616, %v617
        %v619 = vrot.slane %v618, 1
        %v620 = vadd.f32 %v618, %v619
        %v621 = vsel %vm613, %v612, 0.0
        %v622 = vrot.slane %v621, 4
        %v623 = vadd.f32 %v621, %v622
        %v624 = vrot.slane %v623, 2
        %v625 = vadd.f32 %v623, %v624
        %v626 = vrot.slane %v625, 1
        %v627 = vadd.f32 %v625, %v626
        %v628 = vmul.f32 %v595, %v604
        %v629 = vmul.f32 %v596, %v604
        %v630 = vsel %vm613, %v628, 0.0
        %v631 = vrot.slane %v630, 4
        %v632 = vadd.f32 %v630, %v631
        %v633 = vrot.slane %v632, 2
        %v634 = vadd.f32 %v632, %v633
        %v635 = vrot.slane %v634, 1
        %v636 = vadd.f32 %v634, %v635
        %v637 = vsel %vm613, %v629, 0.0
        %v638 = vrot.slane %v637, 4
        %v639 = vadd.f32 %v637, %v638
        %v640 = vrot.slane %v639, 2
        %v641 = vadd.f32 %v639, %v640
        %v642 = vrot.slane %v641, 1
        %v643 = vadd.f32 %v641, %v642
        %v644 = vld [vmem:[#allocation2] sm:$0x3]
        %v645 = vadd.f32 %v636, 1.0
        %v646 = vadd.f32 %v643, 1.0
        %v647 = vmul.f32 %v620, %v645
        %v648 = vmul.f32 %v627, %v646
        %vm651 = vcmask 1041409
        %v652 = vsel %vm651, %v648, %v647
        %v654 = vadd.f32 %v644, %v652
        %655 = vst [vmem:[#allocation2] sm:$0x3] %v654
        %p656 = scmp.eq.s32.totalorder %s23, 3
        // Predicated region
        $region145: #{tpu_custom_call.1} parent=131 // pred_check
          %p657 = pneg %p656
        $region146: #{tpu_custom_call.1} parent=131 // pred_check_branch
          %659 = sbr.rel (%p657) target = $region148
        $region147: #{tpu_custom_call.1} parent=131 // pred_region
          %v660 = vld [vmem:[#allocation2] sm:$0x3]
          %vm661 = vcmask 1041408
          %v662 = vsel %vm661, %v660, 0.0
          %663 = vadd.xlane.f32.xlu0 %v662
          %v664 = vpop.xlane.xlu0 %663
          %v665 = vrot.slane %v664, 4
          %v666 = vadd.f32 %v664, %v665
          %v667 = vrot.slane %v666, 2
          %v668 = vadd.f32 %v666, %v667
          %v669 = vrot.slane %v668, 1
          %v670 = vadd.f32 %v668, %v669
          %s671 = vtos %v670
          %s672 = ssub.f32 0.0, %s671
          %s673 = smul.f32 %s672, 0.5
          %s674 = sld [smem:[#allocation3]]
          %s675 = sld [smem:[#allocation3 + $0x1]]
          %s676 = sld [smem:[#allocation3 + $0x2]]
          %s677 = sadd.f32 %s673, %s674
          %s678 = sadd.f32 %s677, %s675
          %s679 = sadd.f32 %s678, %s676
          %s680 = scalar_lea.smem [#allocation6], 0
          %681 = sst [smem:[%s680]] %s679
          %s682 = scalar_lea.smem [#allocation6], 1
          %683 = sst [smem:[%s682]] %s673
          %s684 = scalar_lea.smem [#allocation6], 2
          %685 = sst [smem:[%s684]] %s674
          %s686 = scalar_lea.smem [#allocation6], 3
          %687 = sst [smem:[%s686]] %s676
        $region148: #{tpu_custom_call.1} parent=131 // pred_fallthru
          _
        // Predicated region
        $region149: #{tpu_custom_call.1} parent=131 // pred_check
          %p688 = pneg %p277
        $region150: #{tpu_custom_call.1} parent=131 // pred_check_branch
          %690 = sbr.rel (%p688) target = $region152
        $region151: #{tpu_custom_call.1} parent=131 // pred_region
          %692 = vsyncadd [#allocation7], 0
          %s694 = sshll.u32 %s11, 4
          %s695 = int_to_ptr.hbm [resolvable:$true] %s694
          %697 = dma.smem_to_hbm [#allocation6], 16, %s695, [#allocation7]
        $region152: #{tpu_custom_call.1} parent=131 // pred_fallthru
          _
        // Predicated region
        $region153: #{tpu_custom_call.1} parent=131 // pred_check
          %p698 = pneg %p277
        $region154: #{tpu_custom_call.1} parent=131 // pred_check_branch
          %700 = sbr.rel (%p698) target = $region156
        $region155: #{tpu_custom_call.1} parent=131 // pred_region
          %702 = dma.done [#allocation7], 16
        $region156: #{tpu_custom_call.1} parent=131 // pred_fallthru
          _
        %703 = sfence
      $region132: #{tpu_custom_call.1} parent=5 // pred_fallthru
        _
      %p704 = scmp.le.s32.totalorder 2, %s18
      // Predicated region
      $region157: #{tpu_custom_call.1} parent=5 // pred_check
        %p705 = pneg %p704
      $region158: #{tpu_custom_call.1} parent=5 // pred_check_branch
        %707 = sbr.rel (%p705) target = $region160
      $region159: #{tpu_custom_call.1} parent=5 // pred_region
        %s708 = ssub.s32 %s18, 2
      $region160: #{tpu_custom_call.1} parent=5 // pred_fallthru
        _
    $region6: #{tpu_custom_call.1} parent=1 // loop_footer
      %s22 = sadd.s32 1, %s18
    $region7: #{tpu_custom_call.1} parent=1 // loop_footer_branch
      %17 = sbr.rel target = $region3
    $region8: #{tpu_custom_call.1} parent=1 // loop_exit
      _
    %709 = vsyncpa [#allocation7], 1
    %s710 = scalar_lea.sflag [#allocation7], 1
    %711 = vsyncpa %s710, 1

</llo_original>
